<compile_context>
chip_gen: v7x
topology: tpu7x:2x2x1
jax: 0.10.0
libtpu: 0.0.40
codegen_flags: <defaults>
</compile_context>

<pallas_src>
import math
from functools import partial

import jax
import jax.numpy as jnp
from jax.experimental import pallas as pl
from jax.experimental.pallas import tpu as pltpu


_LANES = 128
_MAX_TILE_ROWS = 4096   # logical output rows per grid step at large n


def _round_up(x, m):
    return (x + m - 1) // m * m


def _choose_tile(n, pack):
    """Pick the per-grid-step tile (in logical rows)."""
    quantum = 8 * pack                       # keeps every block's sublane dim a multiple of 8
    if n <= quantum:
        return quantum
    # Aim for >= 2 grid steps (v7x shards the "parallel" axis across its 2 TensorCores),
    # capped at _MAX_TILE_ROWS to amortize the ~0.35 us per-step overhead on all generations.
    two_step = _round_up((n + 1) // 2, quantum)
    return min(_round_up(_MAX_TILE_ROWS, quantum), two_step)


def _time_enc_kernel(idx_ref, const_ref, out_ref, *, max_index):
    # idx_ref:   (rows, k_dim)    int32  — `pack` logical indices per packed output row,
    #                                      zero-padded along lanes to k_dim (>= 8).
    # const_ref: (k_dim + 2, W)   f32    — rows [0, k_dim): chunk-scatter matrix
    #                                      row  k_dim     : per-lane frequency (div, tiled)
    #                                      row  k_dim + 1 : per-lane selector (1 -> sin, 0 -> cos)
    # out_ref:   (rows, W)        f32    — packed lane-dense output tile (W = pack * hidden)
    k_dim = const_ref.shape[0] - 2

    idx = jnp.clip(idx_ref[...], 0, max_index).astype(jnp.float32)        # (rows, k_dim)
    scatter = const_ref[0:k_dim, :]                                        # (k_dim, W)
    div_lane = const_ref[k_dim:k_dim + 1, :]                               # (1, W)
    sel_lane = const_ref[k_dim + 1:k_dim + 2, :]                           # (1, W)

    # Broadcast each index across its hidden-wide lane chunk: tiny MXU matmul (K = k_dim).
    pos = jnp.dot(idx, scatter, preferred_element_type=jnp.float32)        # (rows, W)
    ang = pos * div_lane                                                   # sublane-broadcast mul

    # Interleaved sin/cos via an exact arithmetic select (sel_lane is exactly 0.0 or 1.0).
    out = sel_lane * jnp.sin(ang) + (1.0 - sel_lane) * jnp.cos(ang)
    out_ref[...] = out.astype(out_ref.dtype)


def time_encoding_lookup(indices, hidden_dim, max_length):
    """Sinusoidal time-encoding lookup: int indices (N,) -> (N, hidden_dim) float32."""
    n = int(indices.shape[0])
    hidden = int(hidden_dim)

    # Pack `pack` logical rows into one 128-lane output row when hidden divides 128.
    pack = _LANES // hidden if (hidden < _LANES and _LANES % hidden == 0) else 1
    w = pack * hidden                      # lane width of one packed output row
    # TODO(synk): hidden_dim values that do not divide 128 fall back to pack=1 and a
    # lane-sparse (masked) output store path — correct but slower.

    tile_n = _choose_tile(max(n, 1), pack)
    n_pad = _round_up(max(n, 1), tile_n)
    rows_per_tile = tile_n // pack
    grid = (n_pad // tile_n,)

    # Index operand: (n_pad // pack, k_dim) int32, zero-padded along lanes to k_dim >= 8 so the
    # broadcast matmul's contracting dim is a full native sublane tile.
    k_dim = max(pack, 8)
    idx = jnp.pad(indices.astype(jnp.int32), (0, n_pad - n))
    idx2 = idx.reshape(n_pad // pack, pack)
    if k_dim > pack:
        idx2 = jnp.pad(idx2, ((0, 0), (0, k_dim - pack)))

    # Constant operand (tiny, VMEM-resident across all grid steps).
    lane = jnp.arange(hidden, dtype=jnp.int32)
    div_full = jnp.exp(((lane // 2) * 2).astype(jnp.float32)
                       * (-math.log(10000.0) / hidden))                    # (hidden,)
    sel_full = (lane % 2 == 0).astype(jnp.float32)                         # 1 -> sin, 0 -> cos
    div_row = jnp.tile(div_full, (pack,))[None, :]                         # (1, W)
    sel_row = jnp.tile(sel_full, (pack,))[None, :]                         # (1, W)
    scatter = (jnp.arange(w, dtype=jnp.int32)[None, :] // hidden
               == jnp.arange(pack, dtype=jnp.int32)[:, None]).astype(jnp.float32)  # (pack, W)
    scatter = jnp.pad(scatter, ((0, k_dim - pack), (0, 0)))                # (k_dim, W)
    const = jnp.concatenate([scatter, div_row, sel_row], axis=0)           # (k_dim + 2, W)

    kernel = partial(_time_enc_kernel, max_index=max_length - 1)

    out_packed = pl.pallas_call(
        kernel,
        grid_spec=pltpu.PrefetchScalarGridSpec(
            num_scalar_prefetch=0,
            grid=grid,
            in_specs=[
                # per-tile packed indices (contiguous in HBM; feeds the scatter matmul)
                pl.BlockSpec((rows_per_tile, k_dim), lambda i: (i, 0)),
                # constants: resident across all grid steps (constant block index)
                pl.BlockSpec((k_dim + 2, w), lambda i: (0, 0)),
            ],
            out_specs=pl.BlockSpec((rows_per_tile, w), lambda i: (i, 0)),
        ),
        out_shape=jax.ShapeDtypeStruct((n_pad // pack, w), jnp.float32),
        compiler_params=pltpu.CompilerParams(
            dimension_semantics=("parallel",),      # independent tiles -> 2 TCs on v7x
            vmem_limit_bytes=32 * 1024 * 1024,      # explicit budget, safe on v5e/v6e/v7x
        ),
    )(idx2, const)

    # Packed row-major layout == flat (n_pad, hidden) layout; reshape/slice is free.
    return out_packed.reshape(n_pad, hidden)[:n]


class TimeEncoding:
    """JAX/Pallas port of the PyTorch TimeEncoding module (frozen sinusoidal embedding)."""

    def __init__(self, hidden_dim, max_length=1000):
        self.d_model = hidden_dim
        self.max_length = max_length

    def __call__(self, x):
        # x: integer indices, arbitrary shape; output: x.shape + (hidden_dim,)
        lead_shape = x.shape
        flat_idx = x.reshape(-1).astype(jnp.int32)
        out_flat = time_encoding_lookup(flat_idx, self.d_model, self.max_length)
        return out_flat.reshape(*lead_shape, self.d_model)


if __name__ == "__main__":
    hidden_dim = 32
    max_length = 1000
    batch, seq = 2, 8

    key = jax.random.PRNGKey(0)
    x = jax.random.randint(key, (batch, seq), 0, max_length, dtype=jnp.int32)

    mod = TimeEncoding(hidden_dim, max_length=max_length)
    out = jax.block_until_ready(mod(x))

    # Reference: the frozen table exactly as the torch __init__ builds it, gathered with XLA.
    pos = jnp.arange(0, max_length, dtype=jnp.float32)[:, None]
    div = jnp.exp(jnp.arange(0, hidden_dim, 2, dtype=jnp.float32)
                  * -(math.log(10000.0) / hidden_dim))
    ang = pos * div
    table = jnp.zeros((max_length, hidden_dim), dtype=jnp.float32)
    table = table.at[:, 0::2].set(jnp.sin(ang))
    table = table.at[:, 1::2].set(jnp.cos(ang)[:, : hidden_dim // 2])
    ref = jnp.take(table, x.reshape(-1), axis=0).reshape(batch, seq, hidden_dim)

    assert out.shape == (batch, seq, hidden_dim)
    assert out.dtype == jnp.float32
    # Tolerance covers possible sin/cos implementation / argument-reduction differences between
    # the Mosaic in-kernel transcendental path and the XLA-built reference table; values are in
    # [-1, 1], so this still catches any indexing / frequency / interleave bug.
    err = float(jnp.max(jnp.abs(out - ref)))
    assert jnp.allclose(out, ref, atol=5e-4, rtol=0.0), f"max abs err = {err}"

    print("KERNEL_OK")
</pallas_src>

<mosaic_0001>
module attributes {stable_mosaic.version = 11 : i64} {
  func.func @_time_enc_kernel(%arg0: i32, %arg1: memref<8x8xi32, #tpu.memory_space<vmem>>, %arg2: memref<10x128xf32, #tpu.memory_space<vmem>>, %arg3: memref<8x128xf32, #tpu.memory_space<vmem>>) attributes {dimension_semantics = [#tpu.dimension_semantics<parallel>], iteration_bounds = array<i64: 1>, scalar_prefetch = 0 : i64, scratch_operands = 0 : i64, tpu.core_type = #tpu.core_type<tc>, window_params = [{transform_indices = @transform_0, window_bounds = array<i64: 8, 8>}, {pipeline_mode = #tpu.pipeline_mode<synchronous>, transform_indices = @transform_1, window_bounds = array<i64: 10, 128>}, {transform_indices = @transform_2, window_bounds = array<i64: 8, 128>}]} {
    %c0 = arith.constant 0 : index
    %c0_0 = arith.constant 0 : index
    %0 = vector.load %arg1[%c0, %c0_0] : memref<8x8xi32, #tpu.memory_space<vmem>>, vector<8x8xi32>
    %c0_i32 = arith.constant 0 : i32
    %c999_i32 = arith.constant 999 : i32
    %1 = vector.broadcast %c0_i32 : i32 to vector<8x8xi32>
    %2 = arith.maxsi %1, %0 : vector<8x8xi32>
    %3 = vector.broadcast %c999_i32 : i32 to vector<8x8xi32>
    %4 = arith.minsi %3, %2 : vector<8x8xi32>
    %5 = arith.sitofp %4 : vector<8x8xi32> to vector<8x8xf32>
    %c0_1 = arith.constant 0 : index
    %c0_2 = arith.constant 0 : index
    %6 = vector.load %arg2[%c0_1, %c0_2] : memref<10x128xf32, #tpu.memory_space<vmem>>, vector<8x128xf32>
    %c8 = arith.constant 8 : index
    %c0_3 = arith.constant 0 : index
    %7 = vector.load %arg2[%c8, %c0_3] : memref<10x128xf32, #tpu.memory_space<vmem>>, vector<1x128xf32>
    %c9 = arith.constant 9 : index
    %c0_4 = arith.constant 0 : index
    %8 = vector.load %arg2[%c9, %c0_4] : memref<10x128xf32, #tpu.memory_space<vmem>>, vector<1x128xf32>
    %cst = arith.constant dense<0.000000e+00> : vector<8x128xf32>
    %9 = tpu.matmul %5, %6, %cst {dimension_numbers = #tpu.dot_dimension_numbers<[1], [0], [0], [1], [0, 0, 1, 1], [], []>} : vector<8x8xf32>, vector<8x128xf32>, vector<8x128xf32> -> vector<8x128xf32>
    %10 = vector.broadcast %7 : vector<1x128xf32> to vector<8x128xf32>
    %11 = arith.mulf %9, %10 : vector<8x128xf32>
    %12 = math.sin %11 : vector<8x128xf32>
    %13 = vector.broadcast %8 : vector<1x128xf32> to vector<8x128xf32>
    %14 = arith.mulf %13, %12 : vector<8x128xf32>
    %cst_5 = arith.constant 1.000000e+00 : f32
    %15 = vector.broadcast %cst_5 : f32 to vector<1x128xf32>
    %16 = arith.subf %15, %8 : vector<1x128xf32>
    %17 = math.cos %11 : vector<8x128xf32>
    %18 = vector.broadcast %16 : vector<1x128xf32> to vector<8x128xf32>
    %19 = arith.mulf %18, %17 : vector<8x128xf32>
    %20 = arith.addf %14, %19 : vector<8x128xf32>
    %c0_6 = arith.constant 0 : index
    %c0_7 = arith.constant 0 : index
    %21 = vector.load %arg3[%c0_6, %c0_7] : memref<8x128xf32, #tpu.memory_space<vmem>>, vector<8x128xf32>
    tpu.vector_store %arg3[%c0_6, %c0_7], %20 {strides = array<i32>} : memref<8x128xf32, #tpu.memory_space<vmem>>, vector<8x128xf32>,
    return
  }
  func.func @transform_0(%arg0: i32) -> (i32, i32) {
    %c0_i32 = arith.constant 0 : i32
    %c0_i32_0 = arith.constant 0 : i32
    return %arg0, %c0_i32 : i32, i32
  }
  func.func @transform_1(%arg0: i32) -> (i32, i32) {
    %c0_i32 = arith.constant 0 : i32
    %c0_i32_0 = arith.constant 0 : i32
    %c0_i32_1 = arith.constant 0 : i32
    return %c0_i32, %c0_i32_0 : i32, i32
  }
  func.func @transform_2(%arg0: i32) -> (i32, i32) {
    %c0_i32 = arith.constant 0 : i32
    %c0_i32_0 = arith.constant 0 : i32
    return %arg0, %c0_i32 : i32, i32
  }
}

</mosaic_0001>

<llo_original>
// kernel: tpu_custom_call.1
$region0: #{tpu_custom_call.1}
  #allocation0 [shape = 'u32[]', space=smem, size = 0x4, offset = 0x4, fixed_abs, tag = 'smem constant byte address 0x4 - core index']
  #allocation1 [shape = 'u32[144,128]{1,0:T(1,128)}', space=vmem, size = 0x12000, scoped, tag = 'internal scratch']
  %s0 = inlined_call_operand.hbm [shape: s32[8,8], index: 0, kind: input, shape index: {}]
  %s1 = inlined_call_operand.hbm [shape: f32[10,128], index: 1, kind: input, shape index: {}]
  %s2 = inlined_call_operand.hbm [shape: f32[8,128], index: 2, kind: output, shape index: {}]
  %s3 = sld [smem:[#allocation0]]
  $region26: #{tpu_custom_call.1} parent=0
    _
  %s5 = ssub.s32 1, %s3
  %s6 = scalar_select 0, %s5, %s3
  $region1: #{tpu_custom_call.1} parent=0
    #allocation2 [shape = 'u8[4096]{0}', space=vmem, size = 0x1000, scoped, tag = 'input window, operand 0, single buffered']
    #allocation3 [shape = 's32[1]{0}', space=sflag, size = 0x4, scoped, tag = 'scoped memory for tpu_custom_call.1']
    #allocation4 [shape = 's32[1]{0}', space=sflag, size = 0x4, scoped, tag = 'scoped memory for tpu_custom_call.1']
    #allocation5 [shape = 'u8[8192]{0}', space=vmem, size = 0x2000, scoped, tag = 'input window, operand 1, single buffered']
    #allocation6 [shape = 's32[1]{0}', space=sflag, size = 0x4, scoped, tag = 'scoped memory for tpu_custom_call.1']
    #allocation7 [shape = 'u8[4096]{0}', space=vmem, size = 0x1000, scoped, tag = 'output window, operand 0, single buffered']
    %7 = vsyncpa [#allocation3], 0
    %8 = vsyncpa [#allocation6], 0
    %9 = vsyncpa [#allocation4], 0
    // Predicated region
    $region2: #{tpu_custom_call.1} parent=1 // pred_check
      _
    $region3: #{tpu_custom_call.1} parent=1 // pred_check_branch
      %11 = sbr.rel (0) target = $region5
    $region4: #{tpu_custom_call.1} parent=1 // pred_region
      %s13 = ssub.s32 128, 128
      %14 = vsyncadd [#allocation3], %s13
      %s16 = sshll.u32 [#allocation2], 4
      %s17 = int_to_ptr.vmem [resolvable:$true] %s16
      %19 = dma.hbm_to_vmem [thread:$0]  %s0, 128, %s17, [#allocation3]
    $region5: #{tpu_custom_call.1} parent=1 // pred_fallthru
      _
    // Predicated region
    $region6: #{tpu_custom_call.1} parent=1 // pred_check
      _
    $region7: #{tpu_custom_call.1} parent=1 // pred_check_branch
      %21 = sbr.rel (0) target = $region9
    $region8: #{tpu_custom_call.1} parent=1 // pred_region
      %s23 = ssub.s32 256, 256
      %24 = vsyncadd [#allocation6], %s23
      %s25 = sshll.u32 [#allocation5], 4
      %s26 = int_to_ptr.vmem [resolvable:$true] %s25
      %31 = dma.hbm_to_vmem [thread:$0]  %s1, 256, %s26, [#allocation6], 128, 128, 8
    $region9: #{tpu_custom_call.1} parent=1 // pred_fallthru
      _
    // Predicated region
    $region10: #{tpu_custom_call.1} parent=1 // pred_check
      _
    $region11: #{tpu_custom_call.1} parent=1 // pred_check_branch
      %33 = sbr.rel (0) target = $region13
    $region12: #{tpu_custom_call.1} parent=1 // pred_region
      %34 = dma.done [#allocation3], 128
    $region13: #{tpu_custom_call.1} parent=1 // pred_fallthru
      _
    // Predicated region
    $region14: #{tpu_custom_call.1} parent=1 // pred_check
      _
    $region15: #{tpu_custom_call.1} parent=1 // pred_check_branch
      %36 = sbr.rel (0) target = $region17
    $region16: #{tpu_custom_call.1} parent=1 // pred_region
      %37 = dma.done [#allocation6], 256
    $region17: #{tpu_custom_call.1} parent=1 // pred_fallthru
      _
    %v38 = vld [vmem:[#allocation2] sm:$0xff]
    %vm39 = vcmp.gt.s32.totalorder %v38, 0
    %v40 = vsel %vm39, %v38, 0
    %vm41 = vcmp.lt.s32.totalorder %v40, 999
    %v42 = vsel %vm41, %v40, 999
    %v43 = vcvt.s32.f32 %v42
    %v44 = vld [vmem:[#allocation5] sm:$0xff]
    %v45 = vld [vmem:[#allocation5 + $0x8] sm:$0x1]
    %v46 = vld [vmem:[#allocation5 + $0x9] sm:$0x1]
    %vm47 = vcmask 64512
    %v49 = vsel %vm47, %v43, 0
    %51 = vmatprep.subr.mxu0 0.0
    %52 = vmatpush1.msra.mxu0 %v44
    %53 = vmatprep.subr.mxu0 0.0
    %54 = vmatpush1.msra.mxu0 0.0
    %55 = vmatprep.subr.mxu0 0.0
    %56 = vmatpush1.msra.mxu0 0.0
    %57 = vmatprep.subr.mxu0 0.0
    %58 = vmatpush1.msra.mxu0 0.0
    %59 = vmatprep.subr.mxu0 0.0
    %60 = vmatpush1.msra.mxu0 0.0
    %61 = vmatprep.subr.mxu0 0.0
    %62 = vmatpush1.msra.mxu0 0.0
    %63 = vmatprep.subr.mxu0 0.0
    %64 = vmatpush1.msra.mxu0 0.0
    %65 = vmatprep.subr.mxu0 0.0
    %66 = vmatpush1.msra.mxu0 0.0
    %67 = vmatprep.subr.mxu0 0.0
    %68 = vmatpush1.msra.mxu0 0.0
    %69 = vmatprep.subr.mxu0 0.0
    %70 = vmatpush1.msra.mxu0 0.0
    %71 = vmatprep.subr.mxu0 0.0
    %72 = vmatpush1.msra.mxu0 0.0
    %73 = vmatprep.subr.mxu0 0.0
    %74 = vmatpush1.msra.mxu0 0.0
    %75 = vmatprep.subr.mxu0 0.0
    %76 = vmatpush1.msra.mxu0 0.0
    %77 = vmatprep.subr.mxu0 0.0
    %78 = vmatpush1.msra.mxu0 0.0
    %79 = vmatprep.subr.mxu0 0.0
    %80 = vmatpush1.msra.mxu0 0.0
    %81 = vmatprep.subr.mxu0 0.0
    %82 = vmatpush1.msra.mxu0 0.0
    %83 = vmatprep.subr.mxu0 0.0
    %84 = vmatpush1.msra.mxu0 0.0
    %85 = vmatprep.subr.mxu0 0.0
    %86 = vmatpush1.msra.mxu0 0.0
    %87 = vmatprep.subr.mxu0 0.0
    %88 = vmatpush1.msra.mxu0 0.0
    %89 = vmatprep.subr.mxu0 0.0
    %90 = vmatpush1.msra.mxu0 0.0
    %91 = vmatprep.subr.mxu0 0.0
    %92 = vmatpush1.msra.mxu0 0.0
    %93 = vmatprep.subr.mxu0 0.0
    %94 = vmatpush1.msra.mxu0 0.0
    %95 = vmatprep.subr.mxu0 0.0
    %96 = vmatpush1.msra.mxu0 0.0
    %97 = vmatprep.subr.mxu0 0.0
    %98 = vmatpush1.msra.mxu0 0.0
    %99 = vmatprep.subr.mxu0 0.0
    %100 = vmatpush1.msra.mxu0 0.0
    %101 = vmatprep.subr.mxu0 0.0
    %102 = vmatpush1.msra.mxu0 0.0
    %103 = vmatprep.subr.mxu0 0.0
    %104 = vmatpush1.msra.mxu0 0.0
    %105 = vmatprep.subr.mxu0 0.0
    %106 = vmatpush1.msra.mxu0 0.0
    %107 = vmatprep.subr.mxu0 0.0
    %108 = vmatpush1.msra.mxu0 0.0
    %109 = vmatprep.subr.mxu0 0.0
    %110 = vmatpush1.msra.mxu0 0.0
    %111 = vmatprep.subr.mxu0 0.0
    %112 = vmatpush1.msra.mxu0 0.0
    %113 = vmatprep.subr.mxu0 0.0
    %114 = vmatpush1.msra.mxu0 0.0
    %115 = vmatprep.mubr.f32.mxu0 0.0
    %116 = vmatmul.mubr.f32.gmra.mrb[0].mxu0 %v49
    %v117 = vpop.f32.mrb[0].mxu0
    %v118 = vadd.f32 0.0, %v117
    %v119 = vpop.f32.mrb[0].mxu0
    %120 = vdwg.mxu0
    %v121 = vlaneseq
    %v122 = vshrl.u32 %v121, 7
    %v123 = vsub.s32 0, %v122
    %v124 = vrot.slane %v45, %v123
    %v125 = vmul.f32 %v118, %v124
    %v126 = vand.u32 2147483647, %v125
    %vm127 = vcmp.le.f32.partialorder %v126, 0.7853982
    %vm128 = vcmp.lt.s32.totalorder %v125, 0
    %v129 = vand.u32 %v125, 2139095040
    %v130 = vshrl.u32 %v129, 23
    %v131 = vsub.s32 %v130, 127
    %v132 = vand.u32 2147483647, %v125
    %v133 = vand.u32 %v132, 8388607
    %v134 = vor.u32 %v133, 8388608
    %v135 = vsub.s32 0, %v134
    %v136 = vadd.s32 %v131, 1
    %vm137 = vcmp.gt.s32.totalorder %v136, 0
    %v138 = vsel %vm137, %v136, 0
    %v139 = vshrl.u32 %v138, 5
    %v140 = vand.u32 %v138, 31
    %v141 = vsub.s32 32, %v140
    %v142 = vshrl.u32 683565275, %v141
    %v143 = vshll.u32 683565275, %v140
    %v144 = vshrl.u32 2475754826, %v141
    %v145 = vor.u32 %v143, %v144
    %v146 = vshll.u32 2475754826, %v140
    %v147 = vshrl.u32 2131351028, %v141
    %v148 = vor.u32 %v146, %v147
    %v149 = vshll.u32 2131351028, %v140
    %v150 = vshrl.u32 2102212464, %v141
    %v151 = vor.u32 %v149, %v150
    %v152 = vshll.u32 2102212464, %v140
    %v153 = vshrl.u32 920167782, %v141
    %v154 = vor.u32 %v152, %v153
    %v155 = vshll.u32 920167782, %v140
    %v156 = vshrl.u32 1326507024, %v141
    %v157 = vor.u32 %v155, %v156
    %vm158 = vcmp.lt.s32.totalorder %v139, 1
    %vm159 = vcmp.lt.s32.totalorder %v139, 2
    %vm160 = vcmp.lt.s32.totalorder %v139, 3
    %vm161 = vcmp.lt.s32.totalorder %v139, 4
    %v162 = vsel %vm158, %v142, %v145
    %v163 = vsel %vm161, %v151, 2102212464
    %v164 = vsel %vm160, %v148, %v163
    %v165 = vsel %vm159, %v162, %v164
    %v166 = vsel %vm158, %v145, %v148
    %v167 = vsel %vm161, %v154, 920167782
    %v168 = vsel %vm160, %v151, %v167
    %v169 = vsel %vm159, %v166, %v168
    %v170 = vsel %vm158, %v148, %v151
    %v171 = vsel %vm161, %v157, 1326507024
    %v172 = vsel %vm160, %v154, %v171
    %v173 = vsel %vm159, %v170, %v172
    %v174 = vshll.u32 %v134, 8
    %v175 = vmul.u32.u64.compose %v174, %v173
    %v176 = vextract.low.u32 %v175
    %v177 = vextract.high.u32 %v175
    %v178 = vmul.u32.u64.compose %v174, %v169
    %v179 = vextract.low.u32 %v178
    %v180 = vextract.high.u32 %v178
    %v181 = vmul.u32 %v174, %v165
    %v182 = vadd.s32 %v177, %v179
    %vm183 = vc.u32 %v177, %v179
    %v184 = vadd.s32 %v180, 1
    %v185 = vsel %vm183, %v184, %v180
    %v186 = vadd.s32 %v181, %v185
    %v187 = vadd.s32 %v186, 536870912
    %v188 = vshrl.u32 %v187, 30
    %v189 = vshll.u32 %v188, 30
    %v190 = vsub.s32 %v186, %v189
    %vm191 = vcmp.lt.s32.totalorder %v190, 0
    %v192 = vsub.s32 0, %v190
    %v193 = vsel %vm191, %v192, %v190
    %v194 = vclz %v193
    %v195 = vsub.s32 %v194, 2
    %vm196 = vcmp.gt.s32.totalorder 0, %v195
    %v197 = vsel %vm196, 0, %v195
    %v198 = vsub.s32 32, %v197
    %v199 = vshll.u32 %v190, %v197
    %v200 = vshrl.u32 %v182, %v198
    %v201 = vor.u32 %v199, %v200
    %v202 = vsub.s32 4294967266, %v197
    %v203 = vadd.s32 %v202, 127
    %v204 = vshll.u32 %v203, 23
    %v205 = vor.u32 4788187, %v204
    %v206 = vand.u32 2147483647, %v205
    %v208 = vcvt.s32.f32 %v201
    %v209 = vmul.f32 %v208, %v206
    %v210 = vxor.u32 %v209, 2147483648
    %v211 = vsel %vm128, %v210, %v209
    %v212 = vsub.s32 4, %v188
    %v213 = vsel %vm128, %v212, %v188
    %v214 = vsel %vm127, %v125, %v211
    %v215 = vsel %vm127, 0, %v213
    %v216 = vcosq.f32.pop %v214
    %v217 = vsinq.f32.pop %v214
    %vm218 = vweird.f32 %v125
    %v219 = vadd.s32 %v215, 3
    %v220 = vand.u32 %v219, 3
    %vm221 = vcmp.lt.s32.totalorder %v220, 2
    %vm222 = vcmp.eq.s32.totalorder %v220, 0
    %v223 = vxor.u32 %v217, 2147483648
    %v224 = vsel %vm222, %v216, %v223
    %vm225 = vcmp.eq.s32.totalorder %v220, 2
    %v226 = vxor.u32 %v216, 2147483648
    %v227 = vsel %vm225, %v226, %v217
    %v228 = vsel %vm221, %v224, %v227
    %v229 = vsel %vm218, nan, %v228
    %v230 = vlaneseq
    %v231 = vshrl.u32 %v230, 7
    %v232 = vsub.s32 0, %v231
    %v233 = vrot.slane %v46, %v232
    %v234 = vmul.f32 %v233, %v229
    %v235 = vsub.f32 1.0, %v46
    %v236 = vand.u32 2147483647, %v125
    %vm237 = vcmp.le.f32.partialorder %v236, 0.7853982
    %vm238 = vcmp.lt.s32.totalorder %v125, 0
    %v239 = vand.u32 %v125, 2139095040
    %v240 = vshrl.u32 %v239, 23
    %v241 = vsub.s32 %v240, 127
    %v242 = vand.u32 2147483647, %v125
    %v243 = vand.u32 %v242, 8388607
    %v244 = vor.u32 %v243, 8388608
    %v245 = vsub.s32 0, %v244
    %v246 = vadd.s32 %v241, 1
    %vm247 = vcmp.gt.s32.totalorder %v246, 0
    %v248 = vsel %vm247, %v246, 0
    %v249 = vshrl.u32 %v248, 5
    %v250 = vand.u32 %v248, 31
    %v251 = vsub.s32 32, %v250
    %v252 = vshrl.u32 683565275, %v251
    %v253 = vshll.u32 683565275, %v250
    %v254 = vshrl.u32 2475754826, %v251
    %v255 = vor.u32 %v253, %v254
    %v256 = vshll.u32 2475754826, %v250
    %v257 = vshrl.u32 2131351028, %v251
    %v258 = vor.u32 %v256, %v257
    %v259 = vshll.u32 2131351028, %v250
    %v260 = vshrl.u32 2102212464, %v251
    %v261 = vor.u32 %v259, %v260
    %v262 = vshll.u32 2102212464, %v250
    %v263 = vshrl.u32 920167782, %v251
    %v264 = vor.u32 %v262, %v263
    %v265 = vshll.u32 920167782, %v250
    %v266 = vshrl.u32 1326507024, %v251
    %v267 = vor.u32 %v265, %v266
    %vm268 = vcmp.lt.s32.totalorder %v249, 1
    %vm269 = vcmp.lt.s32.totalorder %v249, 2
    %vm270 = vcmp.lt.s32.totalorder %v249, 3
    %vm271 = vcmp.lt.s32.totalorder %v249, 4
    %v272 = vsel %vm268, %v252, %v255
    %v273 = vsel %vm271, %v261, 2102212464
    %v274 = vsel %vm270, %v258, %v273
    %v275 = vsel %vm269, %v272, %v274
    %v276 = vsel %vm268, %v255, %v258
    %v277 = vsel %vm271, %v264, 920167782
    %v278 = vsel %vm270, %v261, %v277
    %v279 = vsel %vm269, %v276, %v278
    %v280 = vsel %vm268, %v258, %v261
    %v281 = vsel %vm271, %v267, 1326507024
    %v282 = vsel %vm270, %v264, %v281
    %v283 = vsel %vm269, %v280, %v282
    %v284 = vshll.u32 %v244, 8
    %v285 = vmul.u32.u64.compose %v284, %v283
    %v286 = vextract.low.u32 %v285
    %v287 = vextract.high.u32 %v285
    %v288 = vmul.u32.u64.compose %v284, %v279
    %v289 = vextract.low.u32 %v288
    %v290 = vextract.high.u32 %v288
    %v291 = vmul.u32 %v284, %v275
    %v292 = vadd.s32 %v287, %v289
    %vm293 = vc.u32 %v287, %v289
    %v294 = vadd.s32 %v290, 1
    %v295 = vsel %vm293, %v294, %v290
    %v296 = vadd.s32 %v291, %v295
    %v297 = vadd.s32 %v296, 536870912
    %v298 = vshrl.u32 %v297, 30
    %v299 = vshll.u32 %v298, 30
    %v300 = vsub.s32 %v296, %v299
    %vm301 = vcmp.lt.s32.totalorder %v300, 0
    %v302 = vsub.s32 0, %v300
    %v303 = vsel %vm301, %v302, %v300
    %v304 = vclz %v303
    %v305 = vsub.s32 %v304, 2
    %vm306 = vcmp.gt.s32.totalorder 0, %v305
    %v307 = vsel %vm306, 0, %v305
    %v308 = vsub.s32 32, %v307
    %v309 = vshll.u32 %v300, %v307
    %v310 = vshrl.u32 %v292, %v308
    %v311 = vor.u32 %v309, %v310
    %v312 = vsub.s32 4294967266, %v307
    %v313 = vadd.s32 %v312, 127
    %v314 = vshll.u32 %v313, 23
    %v315 = vor.u32 4788187, %v314
    %v316 = vand.u32 2147483647, %v315
    %v318 = vcvt.s32.f32 %v311
    %v319 = vmul.f32 %v318, %v316
    %v320 = vxor.u32 %v319, 2147483648
    %v321 = vsel %vm238, %v320, %v319
    %v322 = vsub.s32 4, %v298
    %v323 = vsel %vm238, %v322, %v298
    %v324 = vsel %vm237, %v125, %v321
    %v325 = vsel %vm237, 0, %v323
    %v326 = vcosq.f32.pop %v324
    %v327 = vsinq.f32.pop %v324
    %vm328 = vweird.f32 %v125
    %v329 = vand.u32 %v325, 3
    %vm330 = vcmp.lt.s32.totalorder %v329, 2
    %vm331 = vcmp.eq.s32.totalorder %v329, 0
    %v332 = vxor.u32 %v327, 2147483648
    %v333 = vsel %vm331, %v326, %v332
    %vm334 = vcmp.eq.s32.totalorder %v329, 2
    %v335 = vxor.u32 %v326, 2147483648
    %v336 = vsel %vm334, %v335, %v327
    %v337 = vsel %vm330, %v333, %v336
    %v338 = vsel %vm328, nan, %v337
    %v339 = vlaneseq
    %v340 = vshrl.u32 %v339, 7
    %v341 = vsub.s32 0, %v340
    %v342 = vrot.slane %v235, %v341
    %v343 = vmul.f32 %v342, %v338
    %v344 = vadd.f32 %v234, %v343
    %345 = vst [vmem:[#allocation7] sm:$0xff] %v344
    // Predicated region
    $region18: #{tpu_custom_call.1} parent=1 // pred_check
      _
    $region19: #{tpu_custom_call.1} parent=1 // pred_check_branch
      %347 = sbr.rel (0) target = $region21
    $region20: #{tpu_custom_call.1} parent=1 // pred_region
      %s349 = ssub.s32 128, 128
      %350 = vsyncadd [#allocation4], %s349
      %s352 = sshll.u32 [#allocation7], 4
      %s353 = int_to_ptr.vmem [resolvable:$true] %s352
      %355 = dma.vmem_to_hbm [thread:$0]  %s353, 128, %s2, [#allocation4]
    $region21: #{tpu_custom_call.1} parent=1 // pred_fallthru
      _
    // Predicated region
    $region22: #{tpu_custom_call.1} parent=1 // pred_check
      _
    $region23: #{tpu_custom_call.1} parent=1 // pred_check_branch
      %357 = sbr.rel (0) target = $region25
    $region24: #{tpu_custom_call.1} parent=1 // pred_region
      %358 = dma.done [#allocation4], 128
    $region25: #{tpu_custom_call.1} parent=1 // pred_fallthru
      _
    %359 = vsyncpa [#allocation3], 1
    %360 = vsyncpa [#allocation6], 1
    %361 = vsyncpa [#allocation4], 1

</llo_original>
